<compile_context>
chip_gen: v5e
topology: v5e:2x2
jax: 0.10.0
libtpu: 0.0.40
codegen_flags: <defaults>
</compile_context>

<pallas_src>
import functools

import jax
import jax.numpy as jnp
from jax import lax
from jax.experimental import pallas as pl
from jax.experimental.pallas import tpu as pltpu


_NEG_BIG = -1e30   # "minus infinity" that never creates inf/NaN paths


def _round_up(x, m):
    return ((x + m - 1) // m) * m


def _choose_tile(n, max_tile):
    """(tile, padded extent) for a dimension streamed over the grid."""
    n = int(n)
    if n <= max_tile:
        return n, n                       # one full-dim block, no padding
    return int(max_tile), _round_up(n, int(max_tile))


def _pad_rows(x, rows):
    if x.shape[0] == rows:
        return x
    return jnp.pad(x, ((0, rows - x.shape[0]),) + ((0, 0),) * (x.ndim - 1))


def _pad_cols(x, cols):
    if x.shape[-1] == cols:
        return x
    pad = [(0, 0)] * (x.ndim - 1) + [(0, cols - x.shape[-1])]
    return jnp.pad(x, pad)


# ----------------------------- kernels ------------------------------------ #

def _weighted_supcon_kernel(anchor_f_ref, feats_ref, anchor_d_ref, dist_ref,
                            row_inv_ref, col_inv_ref, mask_ref, out_ref,
                            m_ref, z_ref, ms_ref, w_ref, s_ref, *,
                            inv_t, inv_dt, scale, tb, tn, inv_b,
                            n_true, b_true, n_padded, b_padded):
    """Online (N-tiled) weighted SupCon loss.

    Grid = (B_tiles [parallel], N_tiles [arbitrary, reduction]).
    Per-anchor-row accumulators (VMEM scratch, shape [tb, 1]):
      m  : running max of contrastive logits adc   (incl. self column)
      z  : sum_j exp(adc - m) over non-self, non-padded columns
      ms : running max of similarity logits ads
      w  : sum_j exp(ads - ms) * mask_ij           (positives only)
      s  : sum_j exp(ads - ms) * mask_ij * adc_ij
    Final per row:  -(t/bt) * (s/w - m - log(z + 1e-12))   (shift cancels,
    algebraically identical to the reference).
    """
    bi = pl.program_id(0)
    nj = pl.program_id(1)
    n_steps = pl.num_programs(1)

    @pl.when(nj == 0)
    def _():
        m_ref[...] = jnp.full_like(m_ref, -jnp.inf)
        ms_ref[...] = jnp.full_like(ms_ref, -jnp.inf)
        z_ref[...] = jnp.zeros_like(z_ref)
        w_ref[...] = jnp.zeros_like(w_ref)
        s_ref[...] = jnp.zeros_like(s_ref)

    anchor_f = anchor_f_ref[...]                      # [tb, C] compute dtype
    feats = feats_ref[...]                            # [tn, C] compute dtype
    anchor_d = anchor_d_ref[...]                      # [tb, D] compute dtype
    dist = dist_ref[...]                              # [tn, D] compute dtype
    row_inv = row_inv_ref[...]                        # [tb, 1] f32
    col_inv = col_inv_ref[...]                        # [1, tn] f32
    mask_f = mask_ref[...].astype(jnp.float32)        # [tb, tn]

    dn = (((1,), (1,)), ((), ()))                     # contract last dims: A@B^T
    adc = lax.dot_general(anchor_f, feats, dn,
                          preferred_element_type=jnp.float32) * inv_t
    raw = lax.dot_general(anchor_d, dist, dn,
                          preferred_element_type=jnp.float32)
    ads = raw * (row_inv * inv_dt) * col_inv          # normalized via precomputed norms

    # Self-contrast (+ column padding) kill mask.
    row_ids = bi * tb + lax.broadcasted_iota(jnp.int32, (tb, tn), 0)
    col_ids = nj * tn + lax.broadcasted_iota(jnp.int32, (tb, tn), 1)
    kill = col_ids == row_ids
    if n_padded:
        kill = jnp.logical_or(kill, col_ids >= n_true)
    adc_z = jnp.where(kill, _NEG_BIG, adc)            # excluded from softmax denom
    pmask = jnp.where(kill, 0.0, mask_f)              # excluded from positives

    # Online max / denominator for the contrastive log-softmax.
    m_old = m_ref[...]
    m_new = jnp.maximum(m_old, jnp.max(adc, axis=1, keepdims=True))
    z_ref[...] = (z_ref[...] * jnp.exp(m_old - m_new)
                  + jnp.sum(jnp.exp(adc_z - m_new), axis=1, keepdims=True))
    m_ref[...] = m_new

    # Online similarity weights (softmax shift cancels in s/w).
    ms_old = ms_ref[...]
    ms_new = jnp.maximum(ms_old, jnp.max(ads, axis=1, keepdims=True))
    alpha = jnp.exp(ms_old - ms_new)
    e = jnp.exp(ads - ms_new) * pmask
    w_ref[...] = w_ref[...] * alpha + jnp.sum(e, axis=1, keepdims=True)
    s_ref[...] = s_ref[...] * alpha + jnp.sum(e * adc, axis=1, keepdims=True)
    ms_ref[...] = ms_new

    @pl.when(nj == n_steps - 1)
    def _():
        # 1e-30 guards rows with no positives (reference would NaN there).
        mean_logit = s_ref[...] / (w_ref[...] + 1e-30)
        log_z = m_ref[...] + jnp.log(z_ref[...] + 1e-12)
        per_row = -scale * (mean_logit - log_z)                   # [tb, 1]
        if b_padded:
            rid = bi * tb + lax.broadcasted_iota(jnp.int32, (tb, 1), 0)
            per_row = jnp.where(rid < b_true, per_row, 0.0)
        out_ref[0, 0] = jnp.sum(per_row) * inv_b                  # SMEM scalar


def _moco_ce_kernel(q_ref, k_ref, queue_ref, out_ref,
                    m_ref, l_ref, lpos_ref, *,
                    inv_t, inv_b, tb, tk, k_true, b_true, k_padded, b_padded):
    """Online (K-tiled) MoCo cross-entropy with label 0.

    Grid = (B_tiles [parallel], K_tiles [arbitrary, reduction]).
    Running log-sum-exp accumulators (m, l) seeded with the positive logit.
    """
    bi = pl.program_id(0)
    kk = pl.program_id(1)
    n_steps = pl.num_programs(1)

    @pl.when(kk == 0)
    def _():
        q32 = q_ref[...].astype(jnp.float32)
        k32 = k_ref[...].astype(jnp.float32)
        lpos = jnp.sum(q32 * k32, axis=1, keepdims=True) * inv_t   # [tb, 1]
        lpos_ref[...] = lpos
        m_ref[...] = lpos              # seed running max with the positive logit
        l_ref[...] = jnp.ones_like(l_ref)     # exp(lpos - m) == 1

    dn = (((1,), (1,)), ((), ()))
    lneg = lax.dot_general(q_ref[...], queue_ref[...], dn,
                           preferred_element_type=jnp.float32) * inv_t
    if k_padded:
        col_ids = kk * tk + lax.broadcasted_iota(jnp.int32, (tb, tk), 1)
        lneg = jnp.where(col_ids < k_true, lneg, _NEG_BIG)

    m_old = m_ref[...]
    m_new = jnp.maximum(m_old, jnp.max(lneg, axis=1, keepdims=True))
    l_ref[...] = (l_ref[...] * jnp.exp(m_old - m_new)
                  + jnp.sum(jnp.exp(lneg - m_new), axis=1, keepdims=True))
    m_ref[...] = m_new

    @pl.when(kk == n_steps - 1)
    def _():
        per_row = m_ref[...] + jnp.log(l_ref[...]) - lpos_ref[...]  # [tb, 1]
        if b_padded:
            rid = bi * tb + lax.broadcasted_iota(jnp.int32, (tb, 1), 0)
            per_row = jnp.where(rid < b_true, per_row, 0.0)
        out_ref[0, 0] = jnp.sum(per_row) * inv_b                    # SMEM scalar


# ----------------------------- wrapper ------------------------------------ #

class WeightedConLoss:
    """JAX/Pallas port of the PyTorch WeightedConLoss forward pass.

    Streamed matmul operands are cast once to `compute_dtype` (bf16 default)
    for half HBM traffic and full MXU rate; accumulation is always f32.
    """

    def __init__(self, temperature=0.07, base_temperature=0.07,
                 dist_temprature=0.07, *, compute_dtype=jnp.bfloat16,
                 block_b=128, block_n=512, block_k=2048):
        self.temperature = float(temperature)
        self.base_temperature = float(base_temperature)
        self.dist_temperature = float(dist_temprature)
        self.compute_dtype = compute_dtype
        self.block_b = int(block_b)     # anchor-row tile (128 keeps gb>=2 at B>=256)
        self.block_n = int(block_n)     # contrast tile (SupCon branch)
        self.block_k = int(block_k)     # queue tile (MoCo branch)

    # ---- mask branch: weighted SupCon ------------------------------------ #
    def _supcon(self, features, dist, mask):
        B, N = int(mask.shape[0]), int(mask.shape[1])
        C = int(features.shape[1])
        D = int(dist.shape[1])
        cdt = self.compute_dtype

        feats = features.astype(cdt)                     # [N, C]  streamed
        dist_c = dist.astype(cdt)                        # [N, D]  streamed
        anchor_f = feats[:B]                             # [B, C]
        anchor_d = dist_c[:B]                            # [B, D]  (unnormalized)

        # dist norms computed once (f32): row / column inverse-norm vectors.
        inv_norm = lax.rsqrt(
            jnp.sum(jnp.square(dist.astype(jnp.float32)), axis=1))  # [N]
        row_inv = inv_norm[:B, None]                     # [B, 1] f32
        col_inv = inv_norm[None, :]                      # [1, N] f32

        # Never upcast the mask stream; bools go to int8 (1 byte / elem).
        if mask.dtype == jnp.bool_:
            mask = mask.astype(jnp.int8)

        tb, Bp = _choose_tile(B, self.block_b)
        tn, Np = _choose_tile(N, self.block_n)
        gb, gn = Bp // tb, Np // tn

        # Pad to tile multiples (zero rows / cols; masked out in-kernel).
        anchor_f = _pad_rows(anchor_f, Bp)
        anchor_d = _pad_rows(anchor_d, Bp)
        row_inv = _pad_rows(row_inv, Bp)
        feats = _pad_rows(feats, Np)
        dist_c = _pad_rows(dist_c, Np)
        col_inv = _pad_cols(col_inv, Np)
        mask_p = _pad_cols(_pad_rows(mask, Bp), Np)

        kernel = functools.partial(
            _weighted_supcon_kernel,
            inv_t=1.0 / self.temperature,
            inv_dt=1.0 / self.dist_temperature,
            scale=self.temperature / self.base_temperature,
            tb=tb, tn=tn, inv_b=1.0 / B,
            n_true=N, b_true=B,
            n_padded=(Np != N), b_padded=(Bp != B))

        isz = jnp.dtype(cdt).itemsize
        msz = jnp.dtype(mask_p.dtype).itemsize
        in_bytes = 2 * ((tb * C + tn * C + tb * D + tn * D) * isz
                        + tb * tn * msz + (tn + tb) * 4)
        tmp_bytes = 8 * tb * tn * 4 + 5 * tb * 4
        vmem_limit = int(min(56 * 2**20,
                             max(in_bytes + tmp_bytes + 4 * 2**20, 16 * 2**20)))

        partial_loss = pl.pallas_call(
            kernel,
            out_shape=jax.ShapeDtypeStruct((gb, 1), jnp.float32),
            grid=(gb, gn),
            in_specs=[
                pl.BlockSpec((tb, C), lambda bi, nj: (bi, 0)),    # anchor feats
                pl.BlockSpec((tn, C), lambda bi, nj: (nj, 0)),    # contrast feats
                pl.BlockSpec((tb, D), lambda bi, nj: (bi, 0)),    # anchor dist
                pl.BlockSpec((tn, D), lambda bi, nj: (nj, 0)),    # contrast dist
                pl.BlockSpec((tb, 1), lambda bi, nj: (bi, 0)),    # row inv-norm
                pl.BlockSpec((1, tn), lambda bi, nj: (0, nj)),    # col inv-norm
                pl.BlockSpec((tb, tn), lambda bi, nj: (bi, nj)),  # mask
            ],
            out_specs=pl.BlockSpec((1, 1), lambda bi, nj: (bi, 0),
                                   memory_space=pltpu.MemorySpace.SMEM),
            scratch_shapes=[pltpu.VMEM((tb, 1), jnp.float32)] * 5,
            compiler_params=pltpu.CompilerParams(
                dimension_semantics=("parallel", "arbitrary"),
                vmem_limit_bytes=vmem_limit),
        )(anchor_f, feats, anchor_d, dist_c, row_inv, col_inv, mask_p)
        return jnp.sum(partial_loss)

    # ---- no-mask branch: MoCo-style cross-entropy ------------------------- #
    def _moco(self, features, batch_size):
        B = int(batch_size)
        C = int(features.shape[1])
        K = int(features.shape[0]) - 2 * B
        cdt = self.compute_dtype

        q = features[:B].astype(cdt)                     # [B, C]
        k = features[B:2 * B].astype(cdt)                # [B, C]
        if K <= 0:
            # logits == [l_pos] only -> cross-entropy with label 0 is exactly 0.
            return jnp.zeros((), jnp.float32)
        queue = features[2 * B:].astype(cdt)             # [K, C] row-major

        tb, Bp = _choose_tile(B, self.block_b)
        tk, Kp = _choose_tile(K, self.block_k)
        gb, gk = Bp // tb, Kp // tk

        q = _pad_rows(q, Bp)
        k = _pad_rows(k, Bp)
        queue = _pad_rows(queue, Kp)

        kernel = functools.partial(
            _moco_ce_kernel, inv_t=1.0 / self.temperature, inv_b=1.0 / B,
            tb=tb, tk=tk, k_true=K, b_true=B,
            k_padded=(Kp != K), b_padded=(Bp != B))

        isz = jnp.dtype(cdt).itemsize
        in_bytes = 2 * (2 * tb * C + tk * C) * isz
        tmp_bytes = 4 * tb * tk * 4 + 3 * tb * 4
        vmem_limit = int(min(56 * 2**20,
                             max(in_bytes + tmp_bytes + 4 * 2**20, 16 * 2**20)))

        partial_loss = pl.pallas_call(
            kernel,
            out_shape=jax.ShapeDtypeStruct((gb, 1), jnp.float32),
            grid=(gb, gk),
            in_specs=[
                pl.BlockSpec((tb, C), lambda bi, kk: (bi, 0)),
                pl.BlockSpec((tb, C), lambda bi, kk: (bi, 0)),
                # TODO(synk): try pipeline_mode=pl.Buffered(3) on this stream
                # if profiling shows exposed DMA at very large K.
                pl.BlockSpec((tk, C), lambda bi, kk: (kk, 0)),
            ],
            out_specs=pl.BlockSpec((1, 1), lambda bi, kk: (bi, 0),
                                   memory_space=pltpu.MemorySpace.SMEM),
            scratch_shapes=[pltpu.VMEM((tb, 1), jnp.float32)] * 3,
            compiler_params=pltpu.CompilerParams(
                dimension_semantics=("parallel", "arbitrary"),
                vmem_limit_bytes=vmem_limit),
        )(q, k, queue)
        return jnp.sum(partial_loss)

    def __call__(self, features, dist, partY=None, args=None, epoch=None,
                 mask=None, batch_size=-1):
        # partY / args / epoch are unused by the reference forward.
        if mask is not None:
            return self._supcon(features, dist, mask)
        return self._moco(features, batch_size)


# --------------------------- pure-JAX references --------------------------- #

def _ref_supcon(features, dist, mask, t, bt, dt):
    features = features.astype(jnp.float32)
    dist = dist.astype(jnp.float32)
    mask = mask.astype(jnp.float32)
    B, N = mask.shape
    adc = (features[:B] @ features.T) / t
    logits = adc - jnp.max(adc, axis=1, keepdims=True)
    logits_mask = jnp.ones((B, N)).at[jnp.arange(B), jnp.arange(B)].set(0.0)
    mask = logits_mask * mask
    dist_norm = dist / jnp.linalg.norm(dist, axis=-1, keepdims=True)
    ads = (dist_norm[:B] @ dist_norm.T) / dt
    logits_simi = ads - jnp.max(ads, axis=1, keepdims=True)
    exp_simi = jnp.exp(logits_simi) * mask
    weight = exp_simi / jnp.sum(exp_simi, axis=1, keepdims=True)
    exp_logits = jnp.exp(logits) * logits_mask
    log_prob = logits - jnp.log(jnp.sum(exp_logits, axis=1, keepdims=True) + 1e-12)
    loss = -(t / bt) * weight * log_prob
    return jnp.mean(jnp.sum(loss, axis=1))


def _ref_moco(features, B, t):
    features = features.astype(jnp.float32)
    q, k, queue = features[:B], features[B:2 * B], features[2 * B:]
    l_pos = jnp.sum(q * k, axis=1, keepdims=True)
    l_neg = q @ queue.T
    logits = jnp.concatenate([l_pos, l_neg], axis=1) / t
    lse = jax.scipy.special.logsumexp(logits, axis=1)
    return jnp.mean(lse - logits[:, 0])


# --------------------------------- main ------------------------------------ #

if __name__ == "__main__":
    key = jax.random.PRNGKey(0)
    T = 0.07
    loss_fn = WeightedConLoss()
    kf, kd, km, kf3, kd3, kq4 = jax.random.split(key, 6)

    # ------------- 1) mask branch (weighted SupCon), single-tile ----------- #
    B, N, C, D = 8, 16, 128, 128
    features = jax.random.normal(kf, (N, C), jnp.float32)
    features = features / jnp.linalg.norm(features, axis=1, keepdims=True)
    dist = jax.random.uniform(kd, (N, D), jnp.float32) + 0.1
    features = features.astype(jnp.bfloat16)      # bf16 model outputs
    dist = dist.astype(jnp.bfloat16)
    labels = jnp.arange(N) % 2
    mask = (labels[:B, None] == labels[None, :]).astype(jnp.float32)

    out1 = loss_fn(features, dist, None, None, 0, mask=mask, batch_size=B)
    jax.block_until_ready(out1)
    ref1 = _ref_supcon(features, dist, mask, T, T, T)
    assert jnp.allclose(out1, ref1, rtol=2e-3, atol=2e-3), (out1, ref1)

    # ------------- 2) no-mask branch (MoCo), single-tile queue ------------- #
    K = 16
    feats2 = jax.random.normal(km, (2 * B + K, C), jnp.float32)
    feats2 = (feats2 / jnp.linalg.norm(feats2, axis=1, keepdims=True)
              ).astype(jnp.bfloat16)
    out2 = loss_fn(feats2, dist, mask=None, batch_size=B)
    jax.block_until_ready(out2)
    ref2 = _ref_moco(feats2, B, T)
    assert jnp.allclose(out2, ref2, rtol=2e-3, atol=2e-3), (out2, ref2)

    # ------------- 3) mask branch, padded multi-tile contrast dim ---------- #
    small = WeightedConLoss(block_n=256, block_k=256)
    N3 = 320                                       # pads to 512 = 2 x 256
    f3 = jax.random.normal(kf3, (N3, C), jnp.float32)
    f3 = (f3 / jnp.linalg.norm(f3, axis=1, keepdims=True)).astype(jnp.bfloat16)
    d3 = (jax.random.uniform(kd3, (N3, D), jnp.float32) + 0.1
          ).astype(jnp.bfloat16)
    lab3 = jnp.arange(N3) % 4
    mask3 = (lab3[:B, None] == lab3[None, :]).astype(jnp.bfloat16)
    out3 = small(f3, d3, None, None, 0, mask=mask3, batch_size=B)
    jax.block_until_ready(out3)
    ref3 = _ref_supcon(f3, d3, mask3, T, T, T)
    assert jnp.allclose(out3, ref3, rtol=2e-3, atol=2e-3), (out3, ref3)

    # ------------- 4) no-mask branch, padded multi-tile queue -------------- #
    K4 = 300                                       # pads to 512 = 2 x 256
    f4 = jax.random.normal(kq4, (2 * B + K4, C), jnp.float32)
    f4 = (f4 / jnp.linalg.norm(f4, axis=1, keepdims=True)).astype(jnp.bfloat16)
    out4 = small(f4, d3, mask=None, batch_size=B)
    jax.block_until_ready(out4)
    ref4 = _ref_moco(f4, B, T)
    assert jnp.allclose(out4, ref4, rtol=2e-3, atol=2e-3), (out4, ref4)

    print("KERNEL_OK")
</pallas_src>

<mosaic_0001>
module attributes {stable_mosaic.version = 11 : i64} {
  func.func @_weighted_supcon_kernel(%arg0: i32, %arg1: i32, %arg2: memref<8x128xbf16, #tpu.memory_space<vmem>>, %arg3: memref<16x128xbf16, #tpu.memory_space<vmem>>, %arg4: memref<8x128xbf16, #tpu.memory_space<vmem>>, %arg5: memref<16x128xbf16, #tpu.memory_space<vmem>>, %arg6: memref<8x1xf32, #tpu.memory_space<vmem>>, %arg7: memref<1x16xf32, #tpu.memory_space<vmem>>, %arg8: memref<8x16xf32, #tpu.memory_space<vmem>>, %arg9: memref<1x1xf32, #tpu.memory_space<smem>>, %arg10: memref<8x1xf32, #tpu.memory_space<vmem>>, %arg11: memref<8x1xf32, #tpu.memory_space<vmem>>, %arg12: memref<8x1xf32, #tpu.memory_space<vmem>>, %arg13: memref<8x1xf32, #tpu.memory_space<vmem>>, %arg14: memref<8x1xf32, #tpu.memory_space<vmem>>) attributes {dimension_semantics = [#tpu.dimension_semantics<parallel>, #tpu.dimension_semantics<arbitrary>], iteration_bounds = array<i64: 1, 1>, scalar_prefetch = 0 : i64, scratch_operands = 5 : i64, tpu.core_type = #tpu.core_type<tc>, window_params = [{transform_indices = @transform_0, window_bounds = array<i64: 8, 128>}, {transform_indices = @transform_1, window_bounds = array<i64: 16, 128>}, {transform_indices = @transform_2, window_bounds = array<i64: 8, 128>}, {transform_indices = @transform_3, window_bounds = array<i64: 16, 128>}, {transform_indices = @transform_4, window_bounds = array<i64: 8, 1>}, {transform_indices = @transform_5, window_bounds = array<i64: 1, 16>}, {transform_indices = @transform_6, window_bounds = array<i64: 8, 16>}, {transform_indices = @transform_7, window_bounds = array<i64: 1, 1>}]} {
    %c0_i32 = arith.constant 0 : i32
    %0 = arith.cmpi eq, %arg1, %c0_i32 : i32
    %1 = arith.extui %0 : i1 to i32
    %c0_i32_0 = arith.constant 0 : i32
    %2 = arith.cmpi ne, %1, %c0_i32_0 : i32
    scf.if %2 {
      %cst_46 = arith.constant 0xFF800000 : f32
      %76 = vector.broadcast %cst_46 : f32 to vector<8x1xf32>
      %c0_47 = arith.constant 0 : index
      %c0_48 = arith.constant 0 : index
      %77 = vector.load %arg10[%c0_47, %c0_48] : memref<8x1xf32, #tpu.memory_space<vmem>>, vector<8x1xf32>
      tpu.vector_store %arg10[%c0_47, %c0_48], %76 {strides = array<i32>} : memref<8x1xf32, #tpu.memory_space<vmem>>, vector<8x1xf32>,
      %cst_49 = arith.constant 0xFF800000 : f32
      %78 = vector.broadcast %cst_49 : f32 to vector<8x1xf32>
      %c0_50 = arith.constant 0 : index
      %c0_51 = arith.constant 0 : index
      %79 = vector.load %arg12[%c0_50, %c0_51] : memref<8x1xf32, #tpu.memory_space<vmem>>, vector<8x1xf32>
      tpu.vector_store %arg12[%c0_50, %c0_51], %78 {strides = array<i32>} : memref<8x1xf32, #tpu.memory_space<vmem>>, vector<8x1xf32>,
      %cst_52 = arith.constant 0.000000e+00 : f32
      %80 = vector.broadcast %cst_52 : f32 to vector<8x1xf32>
      %c0_53 = arith.constant 0 : index
      %c0_54 = arith.constant 0 : index
      %81 = vector.load %arg11[%c0_53, %c0_54] : memref<8x1xf32, #tpu.memory_space<vmem>>, vector<8x1xf32>
      tpu.vector_store %arg11[%c0_53, %c0_54], %80 {strides = array<i32>} : memref<8x1xf32, #tpu.memory_space<vmem>>, vector<8x1xf32>,
      %cst_55 = arith.constant 0.000000e+00 : f32
      %82 = vector.broadcast %cst_55 : f32 to vector<8x1xf32>
      %c0_56 = arith.constant 0 : index
      %c0_57 = arith.constant 0 : index
      %83 = vector.load %arg13[%c0_56, %c0_57] : memref<8x1xf32, #tpu.memory_space<vmem>>, vector<8x1xf32>
      tpu.vector_store %arg13[%c0_56, %c0_57], %82 {strides = array<i32>} : memref<8x1xf32, #tpu.memory_space<vmem>>, vector<8x1xf32>,
      %cst_58 = arith.constant 0.000000e+00 : f32
      %84 = vector.broadcast %cst_58 : f32 to vector<8x1xf32>
      %c0_59 = arith.constant 0 : index
      %c0_60 = arith.constant 0 : index
      %85 = vector.load %arg14[%c0_59, %c0_60] : memref<8x1xf32, #tpu.memory_space<vmem>>, vector<8x1xf32>
      tpu.vector_store %arg14[%c0_59, %c0_60], %84 {strides = array<i32>} : memref<8x1xf32, #tpu.memory_space<vmem>>, vector<8x1xf32>,
    } else {
    }
    %c0 = arith.constant 0 : index
    %c0_1 = arith.constant 0 : index
    %3 = vector.load %arg2[%c0, %c0_1] : memref<8x128xbf16, #tpu.memory_space<vmem>>, vector<8x128xbf16>
    %c0_2 = arith.constant 0 : index
    %c0_3 = arith.constant 0 : index
    %4 = vector.load %arg3[%c0_2, %c0_3] : memref<16x128xbf16, #tpu.memory_space<vmem>>, vector<16x128xbf16>
    %c0_4 = arith.constant 0 : index
    %c0_5 = arith.constant 0 : index
    %5 = vector.load %arg4[%c0_4, %c0_5] : memref<8x128xbf16, #tpu.memory_space<vmem>>, vector<8x128xbf16>
    %c0_6 = arith.constant 0 : index
    %c0_7 = arith.constant 0 : index
    %6 = vector.load %arg5[%c0_6, %c0_7] : memref<16x128xbf16, #tpu.memory_space<vmem>>, vector<16x128xbf16>
    %c0_8 = arith.constant 0 : index
    %c0_9 = arith.constant 0 : index
    %7 = vector.load %arg6[%c0_8, %c0_9] : memref<8x1xf32, #tpu.memory_space<vmem>>, vector<8x1xf32>
    %c0_10 = arith.constant 0 : index
    %c0_11 = arith.constant 0 : index
    %8 = vector.load %arg7[%c0_10, %c0_11] : memref<1x16xf32, #tpu.memory_space<vmem>>, vector<1x16xf32>
    %c0_12 = arith.constant 0 : index
    %c0_13 = arith.constant 0 : index
    %9 = vector.load %arg8[%c0_12, %c0_13] : memref<8x16xf32, #tpu.memory_space<vmem>>, vector<8x16xf32>
    %cst = arith.constant dense<0.000000e+00> : vector<8x16xf32>
    %10 = tpu.matmul %3, %4, %cst {dimension_numbers = #tpu.dot_dimension_numbers<[1], [1], [0], [0], [0, 0, 1, 0], [], []>} : vector<8x128xbf16>, vector<16x128xbf16>, vector<8x16xf32> -> vector<8x16xf32>
    %cst_14 = arith.constant 14.2857141 : f32
    %11 = vector.broadcast %cst_14 : f32 to vector<8x16xf32>
    %12 = arith.mulf %10, %11 : vector<8x16xf32>
    %cst_15 = arith.constant dense<0.000000e+00> : vector<8x16xf32>
    %13 = tpu.matmul %5, %6, %cst_15 {dimension_numbers = #tpu.dot_dimension_numbers<[1], [1], [0], [0], [0, 0, 1, 0], [], []>} : vector<8x128xbf16>, vector<16x128xbf16>, vector<8x16xf32> -> vector<8x16xf32>
    %cst_16 = arith.constant 14.2857141 : f32
    %14 = vector.broadcast %cst_16 : f32 to vector<8x1xf32>
    %15 = arith.mulf %7, %14 : vector<8x1xf32>
    %16 = vector.broadcast %15 : vector<8x1xf32> to vector<8x16xf32>
    %17 = arith.mulf %13, %16 : vector<8x16xf32>
    %18 = vector.broadcast %8 : vector<1x16xf32> to vector<8x16xf32>
    %19 = arith.mulf %17, %18 : vector<8x16xf32>
    %c8_i32 = arith.constant 8 : i32
    %20 = arith.muli %arg0, %c8_i32 : i32
    %21 = tpu.iota {dimensions = array<i32: 0>} : vector<8x16xi32>
    %22 = vector.broadcast %20 : i32 to vector<8x16xi32>
    %23 = arith.addi %22, %21 : vector<8x16xi32>
    %c16_i32 = arith.constant 16 : i32
    %24 = arith.muli %arg1, %c16_i32 : i32
    %25 = tpu.iota {dimensions = array<i32: 1>} : vector<8x16xi32>
    %26 = vector.broadcast %24 : i32 to vector<8x16xi32>
    %27 = arith.addi %26, %25 : vector<8x16xi32>
    %28 = arith.cmpi eq, %27, %23 : vector<8x16xi32>
    %cst_17 = arith.constant -1.000000e+30 : f32
    %29 = vector.broadcast %cst_17 : f32 to vector<8x16xf32>
    %30 = arith.select %28, %29, %12 : vector<8x16xi1>, vector<8x16xf32>
    %cst_18 = arith.constant 0.000000e+00 : f32
    %31 = vector.broadcast %cst_18 : f32 to vector<8x16xf32>
    %32 = arith.select %28, %31, %9 : vector<8x16xi1>, vector<8x16xf32>
    %c0_19 = arith.constant 0 : index
    %c0_20 = arith.constant 0 : index
    %33 = vector.load %arg10[%c0_19, %c0_20] : memref<8x1xf32, #tpu.memory_space<vmem>>, vector<8x1xf32>
    %cst_21 = arith.constant dense<0xFF800000> : vector<8xf32>
    %34 = vector.multi_reduction <maximumf>, %12, %cst_21 [1] : vector<8x16xf32> to vector<8xf32>
    %35 = vector.shape_cast %34 : vector<8xf32> to vector<8x1xf32>
    %36 = arith.maximumf %33, %35 : vector<8x1xf32>
    %c0_22 = arith.constant 0 : index
    %c0_23 = arith.constant 0 : index
    %37 = vector.load %arg11[%c0_22, %c0_23] : memref<8x1xf32, #tpu.memory_space<vmem>>, vector<8x1xf32>
    %38 = arith.subf %33, %36 : vector<8x1xf32>
    %39 = math.exp %38 : vector<8x1xf32>
    %40 = arith.mulf %37, %39 : vector<8x1xf32>
    %41 = vector.broadcast %36 : vector<8x1xf32> to vector<8x16xf32>
    %42 = arith.subf %30, %41 : vector<8x16xf32>
    %43 = math.exp %42 : vector<8x16xf32>
    %cst_24 = arith.constant dense<0.000000e+00> : vector<8xf32>
    %44 = vector.multi_reduction <add>, %43, %cst_24 [1] : vector<8x16xf32> to vector<8xf32>
    %45 = vector.shape_cast %44 : vector<8xf32> to vector<8x1xf32>
    %46 = arith.addf %40, %45 : vector<8x1xf32>
    %c0_25 = arith.constant 0 : index
    %c0_26 = arith.constant 0 : index
    %47 = vector.load %arg11[%c0_25, %c0_26] : memref<8x1xf32, #tpu.memory_space<vmem>>, vector<8x1xf32>
    tpu.vector_store %arg11[%c0_25, %c0_26], %46 {strides = array<i32>} : memref<8x1xf32, #tpu.memory_space<vmem>>, vector<8x1xf32>,
    %c0_27 = arith.constant 0 : index
    %c0_28 = arith.constant 0 : index
    %48 = vector.load %arg10[%c0_27, %c0_28] : memref<8x1xf32, #tpu.memory_space<vmem>>, vector<8x1xf32>
    tpu.vector_store %arg10[%c0_27, %c0_28], %36 {strides = array<i32>} : memref<8x1xf32, #tpu.memory_space<vmem>>, vector<8x1xf32>,
    %c0_29 = arith.constant 0 : index
    %c0_30 = arith.constant 0 : index
    %49 = vector.load %arg12[%c0_29, %c0_30] : memref<8x1xf32, #tpu.memory_space<vmem>>, vector<8x1xf32>
    %cst_31 = arith.constant dense<0xFF800000> : vector<8xf32>
    %50 = vector.multi_reduction <maximumf>, %19, %cst_31 [1] : vector<8x16xf32> to vector<8xf32>
    %51 = vector.shape_cast %50 : vector<8xf32> to vector<8x1xf32>
    %52 = arith.maximumf %49, %51 : vector<8x1xf32>
    %53 = arith.subf %49, %52 : vector<8x1xf32>
    %54 = math.exp %53 : vector<8x1xf32>
    %55 = vector.broadcast %52 : vector<8x1xf32> to vector<8x16xf32>
    %56 = arith.subf %19, %55 : vector<8x16xf32>
    %57 = math.exp %56 : vector<8x16xf32>
    %58 = arith.mulf %57, %32 : vector<8x16xf32>
    %c0_32 = arith.constant 0 : index
    %c0_33 = arith.constant 0 : index
    %59 = vector.load %arg13[%c0_32, %c0_33] : memref<8x1xf32, #tpu.memory_space<vmem>>, vector<8x1xf32>
    %60 = arith.mulf %59, %54 : vector<8x1xf32>
    %cst_34 = arith.constant dense<0.000000e+00> : vector<8xf32>
    %61 = vector.multi_reduction <add>, %58, %cst_34 [1] : vector<8x16xf32> to vector<8xf32>
    %62 = vector.shape_cast %61 : vector<8xf32> to vector<8x1xf32>
    %63 = arith.addf %60, %62 : vector<8x1xf32>
    %c0_35 = arith.constant 0 : index
    %c0_36 = arith.constant 0 : index
    %64 = vector.load %arg13[%c0_35, %c0_36] : memref<8x1xf32, #tpu.memory_space<vmem>>, vector<8x1xf32>
    tpu.vector_store %arg13[%c0_35, %c0_36], %63 {strides = array<i32>} : memref<8x1xf32, #tpu.memory_space<vmem>>, vector<8x1xf32>,
    %c0_37 = arith.constant 0 : index
    %c0_38 = arith.constant 0 : index
    %65 = vector.load %arg14[%c0_37, %c0_38] : memref<8x1xf32, #tpu.memory_space<vmem>>, vector<8x1xf32>
    %66 = arith.mulf %65, %54 : vector<8x1xf32>
    %67 = arith.mulf %58, %12 : vector<8x16xf32>
    %cst_39 = arith.constant dense<0.000000e+00> : vector<8xf32>
    %68 = vector.multi_reduction <add>, %67, %cst_39 [1] : vector<8x16xf32> to vector<8xf32>
    %69 = vector.shape_cast %68 : vector<8xf32> to vector<8x1xf32>
    %70 = arith.addf %66, %69 : vector<8x1xf32>
    %c0_40 = arith.constant 0 : index
    %c0_41 = arith.constant 0 : index
    %71 = vector.load %arg14[%c0_40, %c0_41] : memref<8x1xf32, #tpu.memory_space<vmem>>, vector<8x1xf32>
    tpu.vector_store %arg14[%c0_40, %c0_41], %70 {strides = array<i32>} : memref<8x1xf32, #tpu.memory_space<vmem>>, vector<8x1xf32>,
    %c0_42 = arith.constant 0 : index
    %c0_43 = arith.constant 0 : index
    %72 = vector.load %arg12[%c0_42, %c0_43] : memref<8x1xf32, #tpu.memory_space<vmem>>, vector<8x1xf32>
    tpu.vector_store %arg12[%c0_42, %c0_43], %52 {strides = array<i32>} : memref<8x1xf32, #tpu.memory_space<vmem>>, vector<8x1xf32>,
    %c0_i32_44 = arith.constant 0 : i32
    %73 = arith.cmpi eq, %arg1, %c0_i32_44 : i32
    %74 = arith.extui %73 : i1 to i32
    %c0_i32_45 = arith.constant 0 : i32
    %75 = arith.cmpi ne, %74, %c0_i32_45 : i32
    scf.if %75 {
      %c0_46 = arith.constant 0 : index
      %c0_47 = arith.constant 0 : index
      %76 = vector.load %arg14[%c0_46, %c0_47] : memref<8x1xf32, #tpu.memory_space<vmem>>, vector<8x1xf32>
      %c0_48 = arith.constant 0 : index
      %c0_49 = arith.constant 0 : index
      %77 = vector.load %arg13[%c0_48, %c0_49] : memref<8x1xf32, #tpu.memory_space<vmem>>, vector<8x1xf32>
      %cst_50 = arith.constant 1.000000e-30 : f32
      %78 = vector.broadcast %cst_50 : f32 to vector<8x1xf32>
      %79 = arith.addf %77, %78 : vector<8x1xf32>
      %80 = arith.divf %76, %79 : vector<8x1xf32>
      %c0_51 = arith.constant 0 : index
      %c0_52 = arith.constant 0 : index
      %81 = vector.load %arg10[%c0_51, %c0_52] : memref<8x1xf32, #tpu.memory_space<vmem>>, vector<8x1xf32>
      %c0_53 = arith.constant 0 : index
      %c0_54 = arith.constant 0 : index
      %82 = vector.load %arg11[%c0_53, %c0_54] : memref<8x1xf32, #tpu.memory_space<vmem>>, vector<8x1xf32>
      %cst_55 = arith.constant 9.99999996E-13 : f32
      %83 = vector.broadcast %cst_55 : f32 to vector<8x1xf32>
      %84 = arith.addf %82, %83 : vector<8x1xf32>
      %85 = math.log %84 : vector<8x1xf32>
      %86 = arith.addf %81, %85 : vector<8x1xf32>
      %87 = arith.subf %80, %86 : vector<8x1xf32>
      %cst_56 = arith.constant -1.000000e+00 : f32
      %88 = vector.broadcast %cst_56 : f32 to vector<8x1xf32>
      %89 = arith.mulf %88, %87 : vector<8x1xf32>
      %90 = vector.shape_cast %89 : vector<8x1xf32> to vector<1x8x1xf32>
      %cst_57 = arith.constant dense<0.000000e+00> : vector<1xf32>
      %91 = vector.multi_reduction <add>, %90, %cst_57 [1, 2] : vector<1x8x1xf32> to vector<1xf32>
      %92 = vector.shape_cast %91 : vector<1xf32> to vector<1x1x1xf32>
      %93 = vector.extract %92[0, 0, 0] : f32 from vector<1x1x1xf32>
      %cst_58 = arith.constant 1.250000e-01 : f32
      %94 = arith.mulf %93, %cst_58 : f32
      %c0_59 = arith.constant 0 : index
      %c0_60 = arith.constant 0 : index
      %95 = memref.load %arg9[%c0_59, %c0_60] : memref<1x1xf32, #tpu.memory_space<smem>>
      memref.store %94, %arg9[%c0_59, %c0_60] : memref<1x1xf32, #tpu.memory_space<smem>>
    } else {
    }
    return
  }
  func.func @transform_0(%arg0: i32, %arg1: i32) -> (i32, i32) {
    %c0_i32 = arith.constant 0 : i32
    %c0_i32_0 = arith.constant 0 : i32
    return %arg0, %c0_i32 : i32, i32
  }
  func.func @transform_1(%arg0: i32, %arg1: i32) -> (i32, i32) {
    %c0_i32 = arith.constant 0 : i32
    %c0_i32_0 = arith.constant 0 : i32
    return %arg1, %c0_i32 : i32, i32
  }
  func.func @transform_2(%arg0: i32, %arg1: i32) -> (i32, i32) {
    %c0_i32 = arith.constant 0 : i32
    %c0_i32_0 = arith.constant 0 : i32
    return %arg0, %c0_i32 : i32, i32
  }
  func.func @transform_3(%arg0: i32, %arg1: i32) -> (i32, i32) {
    %c0_i32 = arith.constant 0 : i32
    %c0_i32_0 = arith.constant 0 : i32
    return %arg1, %c0_i32 : i32, i32
  }
  func.func @transform_4(%arg0: i32, %arg1: i32) -> (i32, i32) {
    %c0_i32 = arith.constant 0 : i32
    %c0_i32_0 = arith.constant 0 : i32
    return %arg0, %c0_i32 : i32, i32
  }
  func.func @transform_5(%arg0: i32, %arg1: i32) -> (i32, i32) {
    %c0_i32 = arith.constant 0 : i32
    %c0_i32_0 = arith.constant 0 : i32
    return %c0_i32, %arg1 : i32, i32
  }
  func.func @transform_6(%arg0: i32, %arg1: i32) -> (i32, i32) {
    %c0_i32 = arith.constant 0 : i32
    return %arg0, %arg1 : i32, i32
  }
  func.func @transform_7(%arg0: i32, %arg1: i32) -> (i32, i32) {
    %c0_i32 = arith.constant 0 : i32
    %c0_i32_0 = arith.constant 0 : i32
    return %arg0, %c0_i32 : i32, i32
  }
}

</mosaic_0001>

<llo_original>
// kernel: tpu_custom_call.1
$region0: #{tpu_custom_call.1}
  #allocation0 [shape = 'u32[]', space=smem, size = 0x4, offset = 0x4, fixed_abs, tag = 'smem constant byte address 0x4 - core index']
  #allocation1 [shape = 'u32[72,128]{1,0:T(1,128)}', space=vmem, size = 0x9000, scoped, tag = 'internal scratch']
  #allocation2 [shape = 'f32[8,1]{1,0:T(8,128)}', space=vmem, size = 0x1000, scoped, tag = 'scratch operand']
  #allocation3 [shape = 'f32[8,1]{1,0:T(8,128)}', space=vmem, size = 0x1000, scoped, tag = 'scratch operand']
  #allocation4 [shape = 'f32[8,1]{1,0:T(8,128)}', space=vmem, size = 0x1000, scoped, tag = 'scratch operand']
  #allocation5 [shape = 'f32[8,1]{1,0:T(8,128)}', space=vmem, size = 0x1000, scoped, tag = 'scratch operand']
  #allocation6 [shape = 'f32[8,1]{1,0:T(8,128)}', space=vmem, size = 0x1000, scoped, tag = 'scratch operand']
  %s0 = inlined_call_operand.hbm [shape: bf16[8,128], index: 0, kind: input, shape index: {}]
  %s1 = inlined_call_operand.vmem [shape: bf16[16,128], index: 1, kind: input, shape index: {}]
  %s2 = inlined_call_operand.hbm [shape: bf16[8,128], index: 2, kind: input, shape index: {}]
  %s3 = inlined_call_operand.hbm [shape: bf16[16,128], index: 3, kind: input, shape index: {}]
  %s4 = inlined_call_operand.vmem [shape: f32[8,1], index: 4, kind: input, shape index: {}]
  %s5 = inlined_call_operand.vmem [shape: f32[1,16], index: 5, kind: input, shape index: {}]
  %s6 = inlined_call_operand.hbm [shape: f32[8,16], index: 6, kind: input, shape index: {}]
  %s7 = inlined_call_operand.hbm [shape: f32[1,1], index: 7, kind: output, shape index: {}]
  %s8 = sld [smem:[#allocation0]]
  $region62: #{tpu_custom_call.1} parent=0
    _
  %s10 = ssub.s32 1, %s8
  %s11 = scalar_select 0, %s10, %s8
  $region1: #{tpu_custom_call.1} parent=0
    #allocation7 [shape = 'u8[2048]{0}', space=vmem, size = 0x800, scoped, tag = 'input window, operand 0, single buffered']
    #allocation8 [shape = 's32[1]{0}', space=sflag, size = 0x4, scoped, tag = 'scoped memory for tpu_custom_call.1']
    #allocation9 [shape = 's32[1]{0}', space=sflag, size = 0x4, scoped, tag = 'scoped memory for tpu_custom_call.1']
    #allocation10 [shape = 'u8[2048]{0}', space=vmem, size = 0x800, scoped, tag = 'input window, operand 2, single buffered']
    #allocation11 [shape = 's32[1]{0}', space=sflag, size = 0x4, scoped, tag = 'scoped memory for tpu_custom_call.1']
    #allocation12 [shape = 'u8[4096]{0}', space=vmem, size = 0x1000, scoped, tag = 'input window, operand 3, single buffered']
    #allocation13 [shape = 'u8[4096]{0}', space=vmem, size = 0x1000, scoped, tag = 'input window, operand 6, single buffered']
    #allocation14 [shape = 's32[1]{0}', space=sflag, size = 0x4, scoped, tag = 'scoped memory for tpu_custom_call.1']
    #allocation15 [shape = 'u8[512]{0}', space=smem, size = 0x200, scoped, tag = 'output window, operand 0, single buffered']
    %12 = vsyncpa [#allocation8], 0
    %13 = vsyncpa [#allocation11], 0
    %14 = vsyncpa [#allocation14], 0
    %15 = vsyncpa [#allocation9], 0
    // Predicated region
    $region2: #{tpu_custom_call.1} parent=1 // pred_check
      _
    $region3: #{tpu_custom_call.1} parent=1 // pred_check_branch
      %17 = sbr.rel (0) target = $region5
    $region4: #{tpu_custom_call.1} parent=1 // pred_region
      %19 = vsyncadd [#allocation8], 0
      %s21 = sshll.u32 %s0, 4
      %s22 = int_to_ptr.hbm [resolvable:$true] %s21
      %s23 = sshll.u32 [#allocation7], 4
      %s24 = int_to_ptr.vmem [resolvable:$true] %s23
      %26 = dma.hbm_to_vmem [thread:$0]  %s22, 64, %s24, [#allocation8]
    $region5: #{tpu_custom_call.1} parent=1 // pred_fallthru
      _
    // Predicated region
    $region6: #{tpu_custom_call.1} parent=1 // pred_check
      _
    $region7: #{tpu_custom_call.1} parent=1 // pred_check_branch
      %28 = sbr.rel (0) target = $region9
    $region8: #{tpu_custom_call.1} parent=1 // pred_region
      _
    $region9: #{tpu_custom_call.1} parent=1 // pred_fallthru
      _
    // Predicated region
    $region10: #{tpu_custom_call.1} parent=1 // pred_check
      _
    $region11: #{tpu_custom_call.1} parent=1 // pred_check_branch
      %30 = sbr.rel (0) target = $region13
    $region12: #{tpu_custom_call.1} parent=1 // pred_region
      %32 = vsyncadd [#allocation11], 0
      %s34 = sshll.u32 %s2, 4
      %s35 = int_to_ptr.hbm [resolvable:$true] %s34
      %s36 = sshll.u32 [#allocation10], 4
      %s37 = int_to_ptr.vmem [resolvable:$true] %s36
      %39 = dma.hbm_to_vmem [thread:$0]  %s35, 64, %s37, [#allocation11]
    $region13: #{tpu_custom_call.1} parent=1 // pred_fallthru
      _
    // Predicated region
    $region14: #{tpu_custom_call.1} parent=1 // pred_check
      _
    $region15: #{tpu_custom_call.1} parent=1 // pred_check_branch
      %41 = sbr.rel (0) target = $region17
    $region16: #{tpu_custom_call.1} parent=1 // pred_region
      %43 = vsyncadd [#allocation11], 0
      %s44 = sshll.u32 %s3, 4
      %s45 = int_to_ptr.hbm [resolvable:$true] %s44
      %s46 = sshll.u32 [#allocation12], 4
      %s47 = int_to_ptr.vmem [resolvable:$true] %s46
      %52 = dma.hbm_to_vmem [thread:$0]  %s45, 128, %s47, [#allocation11], 64, 64, 4
    $region17: #{tpu_custom_call.1} parent=1 // pred_fallthru
      _
    // Predicated region
    $region18: #{tpu_custom_call.1} parent=1 // pred_check
      _
    $region19: #{tpu_custom_call.1} parent=1 // pred_check_branch
      %54 = sbr.rel (0) target = $region21
    $region20: #{tpu_custom_call.1} parent=1 // pred_region
      _
    $region21: #{tpu_custom_call.1} parent=1 // pred_fallthru
      _
    // Predicated region
    $region22: #{tpu_custom_call.1} parent=1 // pred_check
      _
    $region23: #{tpu_custom_call.1} parent=1 // pred_check_branch
      %56 = sbr.rel (0) target = $region25
    $region24: #{tpu_custom_call.1} parent=1 // pred_region
      _
    $region25: #{tpu_custom_call.1} parent=1 // pred_fallthru
      _
    // Predicated region
    $region26: #{tpu_custom_call.1} parent=1 // pred_check
      _
    $region27: #{tpu_custom_call.1} parent=1 // pred_check_branch
      %58 = sbr.rel (0) target = $region29
    $region28: #{tpu_custom_call.1} parent=1 // pred_region
      %60 = vsyncadd [#allocation14], 0
      %s62 = sshll.u32 %s6, 4
      %s63 = int_to_ptr.hbm [resolvable:$true] %s62
      %s64 = sshll.u32 [#allocation13], 4
      %s65 = int_to_ptr.vmem [resolvable:$true] %s64
      %67 = dma.hbm_to_vmem [thread:$0]  %s63, 128, %s65, [#allocation14]
    $region29: #{tpu_custom_call.1} parent=1 // pred_fallthru
      _
    // Predicated region
    $region30: #{tpu_custom_call.1} parent=1 // pred_check
      _
    $region31: #{tpu_custom_call.1} parent=1 // pred_check_branch
      %69 = sbr.rel (0) target = $region33
    $region32: #{tpu_custom_call.1} parent=1 // pred_region
      %71 = dma.done [#allocation8], 64
    $region33: #{tpu_custom_call.1} parent=1 // pred_fallthru
      _
    // Predicated region
    $region34: #{tpu_custom_call.1} parent=1 // pred_check
      _
    $region35: #{tpu_custom_call.1} parent=1 // pred_check_branch
      %73 = sbr.rel (0) target = $region37
    $region36: #{tpu_custom_call.1} parent=1 // pred_region
      %75 = dma.done [#allocation11], 64
    $region37: #{tpu_custom_call.1} parent=1 // pred_fallthru
      _
    // Predicated region
    $region38: #{tpu_custom_call.1} parent=1 // pred_check
      _
    $region39: #{tpu_custom_call.1} parent=1 // pred_check_branch
      %77 = sbr.rel (0) target = $region41
    $region40: #{tpu_custom_call.1} parent=1 // pred_region
      %79 = dma.done [#allocation11], 128
    $region41: #{tpu_custom_call.1} parent=1 // pred_fallthru
      _
    // Predicated region
    $region42: #{tpu_custom_call.1} parent=1 // pred_check
      _
    $region43: #{tpu_custom_call.1} parent=1 // pred_check_branch
      %81 = sbr.rel (0) target = $region45
    $region44: #{tpu_custom_call.1} parent=1 // pred_region
      %83 = dma.done [#allocation14], 128
    $region45: #{tpu_custom_call.1} parent=1 // pred_fallthru
      _
    %p85 = scmp.eq.s32.totalorder 0, 0
    // Predicated region
    $region46: #{tpu_custom_call.1} parent=1 // pred_check
      %p86 = pneg %p85
    $region47: #{tpu_custom_call.1} parent=1 // pred_check_branch
      %88 = sbr.rel (%p86) target = $region49
    $region48: #{tpu_custom_call.1} parent=1 // pred_region
      %vm89 = vcmask 7168
      %90 = vst.msk [vmem:[#allocation2] sm:$0xff] %vm89, -inf
      %91 = vst.msk [vmem:[#allocation4] sm:$0xff] %vm89, -inf
      %92 = vst.msk [vmem:[#allocation3] sm:$0xff] %vm89, 0.0
      %93 = vst.msk [vmem:[#allocation5] sm:$0xff] %vm89, 0.0
      %94 = vst.msk [vmem:[#allocation6] sm:$0xff] %vm89, 0.0
    $region49: #{tpu_custom_call.1} parent=1 // pred_fallthru
      _
    %v95 = vld [vmem:[#allocation7] sm:$0xf]
    %v96 = vld [vmem:[%s1] sm:$0xf]
    %v97 = vld [vmem:[%s1 + $0x4] sm:$0xf]
    %v98 = vld [vmem:[#allocation10] sm:$0xf]
    %v99 = vld [vmem:[#allocation12] sm:$0xf]
    %v100 = vld [vmem:[#allocation12 + $0x4] sm:$0xf]
    %v101 = vld [vmem:[%s4] sm:$0xff]
    %v102 = vld [vmem:[%s5] sm:$0x1]
    %v103 = vld [vmem:[#allocation13] sm:$0xff]
    %v106 = vunpack.c.l.b16 %v96
    %v107 = vunpack.c.l.b16 %v97
    %v108 = vpack.c.b16 %v107, %v106
    %110 = vmatpush.bf16.xpose.msra.mxu0 0
    %111 = vmatpush.bf16.xpose.msra.mxu0 0
    %112 = vmatpush.bf16.xpose.msra.mxu0 0
    %113 = vmatpush.bf16.xpose.msra.mxu0 0
    %114 = vmatpush.bf16.xpose.msra.mxu0 0
    %115 = vmatpush.bf16.xpose.msra.mxu0 0
    %116 = vmatpush.bf16.xpose.msra.mxu0 0
    %117 = vmatpush.bf16.xpose.msra.mxu0 %v108
    %118 = vmatmul.bf16.gmra.mxu0 %v95
    %v119 = vpop.f32.mrf.mxu0
    %v120 = vadd.f32 0.0, %v119
    %v121 = vpop.f32.mrf.mxu0
    %122 = vdwg.mxu0
    %v123 = vmul.f32 %v120, 14.285714
    %v126 = vunpack.c.l.b16 %v99
    %v127 = vunpack.c.l.b16 %v100
    %v128 = vpack.c.b16 %v127, %v126
    %130 = vmatpush.bf16.xpose.msra.mxu0 0
    %131 = vmatpush.bf16.xpose.msra.mxu0 0
    %132 = vmatpush.bf16.xpose.msra.mxu0 0
    %133 = vmatpush.bf16.xpose.msra.mxu0 0
    %134 = vmatpush.bf16.xpose.msra.mxu0 0
    %135 = vmatpush.bf16.xpose.msra.mxu0 0
    %136 = vmatpush.bf16.xpose.msra.mxu0 0
    %137 = vmatpush.bf16.xpose.msra.mxu0 %v128
    %138 = vmatmul.bf16.gmra.mxu0 %v98
    %v139 = vpop.f32.mrf.mxu0
    %v140 = vadd.f32 0.0, %v139
    %v141 = vpop.f32.mrf.mxu0
    %142 = vdwg.mxu0
    %v143 = vmul.f32 %v101, 14.285714
    %145 = vset.pattern.permute.xlu0 0
    %146 = vperm.xlu0 %145, %v143
    %v147 = vpop.permute.xlu0 %146
    %v149 = vmul.f32 %v140, %v147
    %v151 = vperm.slane %v102, 0
    %v153 = vmul.f32 %v149, %v151
    %s154 = smul.u32 0, 8
    %v155 = vlaneseq
    %v156 = vshrl.u32 %v155, 7
    %v157 = vstv %s154
    %v158 = vadd.s32 %v157, %v156
    %s159 = smul.u32 0, 16
    %v160 = vlaneseq
    %v161 = vand.u32 %v160, 127
    %v162 = vstv %s159
    %v163 = vadd.s32 %v162, %v161
    %vm164 = vcmp.eq.s32.totalorder %v163, %v158
    %v165 = vsel %vm164, -1e+30, %v123
    %v166 = vsel %vm164, 0.0, %v103
    %v167 = vld [vmem:[#allocation2] sm:$0xff]
    %vm168 = vcmask 130048
    %v169 = vsel %vm168, %v123, -inf
    %170 = vmax.xlane.f32.xlu0 %v169
    %v171 = vpop.xlane.xlu0 %170
    %v172 = vmax.f32 %v167, %v171
    %v173 = vld [vmem:[#allocation3] sm:$0xff]
    %v174 = vsub.f32 %v167, %v172
    %v175 = vmul.f32 %v174, 1.442695
    %v176 = vpow.pop %v175
    %v177 = vmul.f32 %v173, %v176
    %179 = vset.pattern.permute.xlu0 0
    %180 = vperm.xlu0 %179, %v172
    %v181 = vpop.permute.xlu0 %180
    %v183 = vsub.f32 %v165, %v181
    %v184 = vmul.f32 %v183, 1.442695
    %v185 = vpow.pop %v184
    %v186 = vsel %vm168, %v185, 0.0
    %187 = vadd.xlane.f32.xlu0 %v186
    %v188 = vpop.xlane.xlu0 %187
    %v189 = vadd.f32 %v177, %v188
    %vm190 = vcmask 7168
    %191 = vst.msk [vmem:[#allocation3] sm:$0xff] %vm190, %v189
    %192 = vst.msk [vmem:[#allocation2] sm:$0xff] %vm190, %v172
    %v193 = vld [vmem:[#allocation4] sm:$0xff]
    %v194 = vsel %vm168, %v153, -inf
    %195 = vmax.xlane.f32.xlu0 %v194
    %v196 = vpop.xlane.xlu0 %195
    %v197 = vmax.f32 %v193, %v196
    %v198 = vsub.f32 %v193, %v197
    %v199 = vmul.f32 %v198, 1.442695
    %v200 = vpow.pop %v199
    %202 = vset.pattern.permute.xlu0 0
    %203 = vperm.xlu0 %202, %v197
    %v204 = vpop.permute.xlu0 %203
    %v206 = vsub.f32 %v153, %v204
    %v207 = vmul.f32 %v206, 1.442695
    %v208 = vpow.pop %v207
    %v209 = vmul.f32 %v208, %v166
    %v210 = vld [vmem:[#allocation5] sm:$0xff]
    %v211 = vmul.f32 %v210, %v200
    %v212 = vsel %vm168, %v209, 0.0
    %213 = vadd.xlane.f32.xlu0 %v212
    %v214 = vpop.xlane.xlu0 %213
    %v215 = vadd.f32 %v211, %v214
    %216 = vst.msk [vmem:[#allocation5] sm:$0xff] %vm190, %v215
    %v217 = vld [vmem:[#allocation6] sm:$0xff]
    %v218 = vmul.f32 %v217, %v200
    %v219 = vmul.f32 %v209, %v123
    %v220 = vsel %vm168, %v219, 0.0
    %221 = vadd.xlane.f32.xlu0 %v220
    %v222 = vpop.xlane.xlu0 %221
    %v223 = vadd.f32 %v218, %v222
    %224 = vst.msk [vmem:[#allocation6] sm:$0xff] %vm190, %v223
    %225 = vst.msk [vmem:[#allocation4] sm:$0xff] %vm190, %v197
    // Predicated region
    $region50: #{tpu_custom_call.1} parent=1 // pred_check
      %p226 = pneg %p85
    $region51: #{tpu_custom_call.1} parent=1 // pred_check_branch
      %228 = sbr.rel (%p226) target = $region53
    $region52: #{tpu_custom_call.1} parent=1 // pred_region
      %v229 = vld [vmem:[#allocation6] sm:$0xff]
      %v230 = vld [vmem:[#allocation5] sm:$0xff]
      %v231 = vadd.f32 %v230, 1e-30
      %v232 = vrcp.pop %v231
      %v233 = vmul.f32 %v231, %v232
      %v234 = vsub.f32 1.0, %v233
      %v235 = vmul.f32 %v232, %v234
      %v236 = vadd.f32 %v232, %v235
      %vm237 = vweird.f32 %v231
      %vm238 = vweird.f32 %v232
      %vm239 = vmor %vm237, %vm238
      %v240 = vsel %vm239, %v232, %v236
      %v241 = vand.u32 2147483647, %v231
      %vm242 = vcmp.eq.f32.partialorder %v241, 8.507059e+37
      %v243 = vand.u32 %v231, 2147483648
      %v244 = vor.u32 1.1754944e-38, %v243
      %v245 = vsel %vm242, %v244, %v240
      %v246 = vmul.f32 %v229, %v245
      %v247 = vld [vmem:[#allocation2] sm:$0xff]
      %v248 = vld [vmem:[#allocation3] sm:$0xff]
      %v249 = vadd.f32 %v248, 1e-12
      %v250 = vlog2.pop %v249
      %v251 = vmul.f32 %v250, 0.6931472
      %v252 = vadd.f32 %v247, %v251
      %v253 = vsub.f32 %v246, %v252
      %v254 = vmul.f32 %v253, -1.0
      %v255 = vsel %vm190, %v254, 0.0
      %256 = vadd.xlane.f32.xlu0 %v255
      %v257 = vpop.xlane.xlu0 %256
      %v258 = vrot.slane %v257, 4
      %v259 = vadd.f32 %v257, %v258
      %v260 = vrot.slane %v259, 2
      %v261 = vadd.f32 %v259, %v260
      %v262 = vrot.slane %v261, 1
      %v263 = vadd.f32 %v261, %v262
      %s264 = vtos %v263
      %s265 = smul.f32 %s264, 0.125
      %s266 = scalar_lea.smem [#allocation15], 0
      %267 = sst [smem:[%s266]] %s265
    $region53: #{tpu_custom_call.1} parent=1 // pred_fallthru
      _
    // Predicated region
    $region54: #{tpu_custom_call.1} parent=1 // pred_check
      _
    $region55: #{tpu_custom_call.1} parent=1 // pred_check_branch
      %269 = sbr.rel (0) target = $region57
    $region56: #{tpu_custom_call.1} parent=1 // pred_region
      %271 = vsyncadd [#allocation9], 0
      %s273 = sshll.u32 %s7, 4
      %s274 = int_to_ptr.hbm [resolvable:$true] %s273
      %276 = dma.smem_to_hbm [#allocation15], 16, %s274, [#allocation9]
    $region57: #{tpu_custom_call.1} parent=1 // pred_fallthru
      _
    // Predicated region
    $region58: #{tpu_custom_call.1} parent=1 // pred_check
      _
    $region59: #{tpu_custom_call.1} parent=1 // pred_check_branch
      %278 = sbr.rel (0) target = $region61
    $region60: #{tpu_custom_call.1} parent=1 // pred_region
      %280 = dma.done [#allocation9], 16
    $region61: #{tpu_custom_call.1} parent=1 // pred_fallthru
      _
    %281 = sfence
    %282 = vsyncpa [#allocation8], 1
    %283 = vsyncpa [#allocation11], 1
    %284 = vsyncpa [#allocation14], 1
    %285 = vsyncpa [#allocation9], 1

</llo_original>
